<compile_context>
chip_gen: v7x
topology: tpu7x:2x2x1
jax: 0.10.0
libtpu: 0.0.40
codegen_flags: <defaults>
</compile_context>

<pallas_src>
import jax
import jax.numpy as jnp
from jax.experimental import pallas as pl
from jax.experimental.pallas import tpu as pltpu


def _round_up(x, m):
    return (x + m - 1) // m * m


def _pe_kernel_whole_k(x_ref, w_ref, b_ref, o_ref):
    # x_ref: (tm, Kp)  w_ref: (Kp, tn)  b_ref: (1, tn) f32  o_ref: (tm, tn)
    acc = jnp.dot(x_ref[...], w_ref[...], preferred_element_type=jnp.float32)
    o_ref[...] = (acc + b_ref[...]).astype(o_ref.dtype)


def _pe_kernel_tiled_k(x_ref, w_ref, b_ref, o_ref, acc_ref):
    # Same as above but with a K reduction axis (grid axis 2) and an f32 accumulator.
    k = pl.program_id(2)

    @pl.when(k == 0)
    def _init():
        acc_ref[...] = jnp.zeros_like(acc_ref)

    acc_ref[...] += jnp.dot(x_ref[...], w_ref[...],
                            preferred_element_type=jnp.float32)

    @pl.when(k == pl.num_programs(2) - 1)
    def _finalize():
        o_ref[...] = (acc_ref[...] + b_ref[...]).astype(o_ref.dtype)


def patch_embed(x, weight, bias, patch_size, *,
                compute_dtype=jnp.bfloat16, tm=512, tn=512, tk_max=2048):
    """x: [B, C, H, W] (NCHW). weight: [E, C, P, P]. bias: [E].
    Returns [B, n_patches, E], matching PyTorch PatchEmbed.forward.

    compute_dtype: dtype fed to the MXU (bf16 default: ~2x MXU rate, half the
    HBM/VMEM traffic). Accumulation and the bias add are always f32.
    """
    B, C, H, W = x.shape
    P = patch_size
    assert H % P == 0 and W % P == 0
    nH, nW = H // P, W // P
    E = weight.shape[0]
    K = C * P * P
    M = B * nH * nW
    out_dtype = x.dtype

    # ---- patch extraction glue (XLA side, one HBM pass) --------------------
    patches = x.reshape(B, C, nH, P, nW, P)
    patches = patches.transpose(0, 2, 4, 1, 3, 5)            # [B, nH, nW, C, P, P]
    patches = patches.reshape(M, K).astype(compute_dtype)    # [M, K]

    w2d = weight.reshape(E, K).T.astype(compute_dtype)       # [K, E]
    b2d = bias.reshape(1, E).astype(jnp.float32)              # [1, E]

    # ---- tile / pad to TPU-friendly shapes ----------------------------------
    # Lane (last) dims: multiples of 128; sublane dims: multiples of 16 (covers
    # f32 and bf16 packing). Zero padding keeps the GEMM exact.
    tm = _round_up(min(tm, _round_up(M, 16)), 16)
    tn = _round_up(min(tn, _round_up(E, 128)), 128)
    tk = _round_up(min(tk_max, _round_up(K, 128)), 128)
    Mp = _round_up(M, tm)
    Ep = _round_up(E, tn)
    Kp = _round_up(K, tk)
    n_k = Kp // tk

    patches = jnp.pad(patches, ((0, Mp - M), (0, Kp - K)))
    w2d = jnp.pad(w2d, ((0, Kp - K), (0, Ep - E)))
    b2d = jnp.pad(b2d, ((0, 0), (0, Ep - E)))

    in_bytes = patches.dtype.itemsize
    out_bytes = jnp.zeros((), out_dtype).dtype.itemsize
    cost = pl.CostEstimate(
        flops=2 * M * K * E,
        transcendentals=0,
        bytes_accessed=(M * K + K * E) * in_bytes + E * 4 + M * E * out_bytes,
    )

    if n_k == 1:
        # Whole-K blocks: no accumulator scratch, direct write of each output tile.
        grid_spec = pltpu.PrefetchScalarGridSpec(
            num_scalar_prefetch=0,
            grid=(Mp // tm, Ep // tn),
            in_specs=[
                pl.BlockSpec((tm, Kp), lambda i, j: (i, 0)),   # patch rows
                pl.BlockSpec((Kp, tn), lambda i, j: (0, j)),   # weight cols
                pl.BlockSpec((1, tn), lambda i, j: (0, j)),    # bias slice
            ],
            out_specs=pl.BlockSpec((tm, tn), lambda i, j: (i, j)),
        )
        kernel = _pe_kernel_whole_k
        dim_sem = ("parallel", "parallel")
    else:
        # Large K: reduction axis last, f32 VMEM accumulator, pl.when init/finalize.
        grid_spec = pltpu.PrefetchScalarGridSpec(
            num_scalar_prefetch=0,
            grid=(Mp // tm, Ep // tn, n_k),
            in_specs=[
                pl.BlockSpec((tm, tk), lambda i, j, k: (i, k)),
                pl.BlockSpec((tk, tn), lambda i, j, k: (k, j)),
                pl.BlockSpec((1, tn), lambda i, j, k: (0, j)),
            ],
            out_specs=pl.BlockSpec((tm, tn), lambda i, j, k: (i, j)),
            scratch_shapes=[pltpu.VMEM((tm, tn), jnp.float32)],
        )
        kernel = _pe_kernel_tiled_k
        dim_sem = ("parallel", "parallel", "arbitrary")

    out = pl.pallas_call(
        kernel,
        out_shape=jax.ShapeDtypeStruct((Mp, Ep), out_dtype),
        grid_spec=grid_spec,
        compiler_params=pltpu.CompilerParams(dimension_semantics=dim_sem),
        cost_estimate=cost,
    )(patches, w2d, b2d)

    return out[:M, :E].reshape(B, nH * nW, E)


if __name__ == "__main__":
    # Small shapes consistent with the module: img_size % patch_size == 0.
    B, C, IMG, P, E = 2, 4, 16, 4, 32
    n_patches = (IMG // P) ** 2

    key = jax.random.PRNGKey(0)
    kx, kw, kb = jax.random.split(key, 3)

    x = jax.random.normal(kx, (B, C, IMG, IMG), dtype=jnp.float32)
    # deterministic synthetic conv parameters (shapes from nn.Conv2d(C, E, P, stride=P))
    weight = jax.random.normal(kw, (E, C, P, P), dtype=jnp.float32) * 0.02
    bias = jax.random.normal(kb, (E,), dtype=jnp.float32) * 0.01

    # pure-JAX reference (conv-as-matmul)
    ref = jnp.einsum(
        "bchpwq,ecpq->bhwe",
        x.reshape(B, C, IMG // P, P, IMG // P, P),
        weight,
    ).reshape(B, n_patches, E) + bias

    # f32 compute path (tight numerical check)
    out_f32 = patch_embed(x, weight, bias, patch_size=P, compute_dtype=jnp.float32)
    out_f32 = jax.block_until_ready(out_f32)
    assert out_f32.shape == (B, n_patches, E)
    assert jnp.allclose(out_f32, ref, atol=1e-4, rtol=1e-4)

    # default bf16 MXU path (perf path; f32 accumulation + f32 bias)
    out_bf16 = patch_embed(x, weight, bias, patch_size=P)
    out_bf16 = jax.block_until_ready(out_bf16)
    assert out_bf16.shape == (B, n_patches, E)
    assert jnp.allclose(out_bf16, ref, atol=1e-2, rtol=1e-2)

    # exercise the tiled-K (accumulator) path as well, with a tiny K tile
    out_ktiled = patch_embed(x, weight, bias, patch_size=P,
                             compute_dtype=jnp.float32, tk_max=128)
    out_ktiled = jax.block_until_ready(out_ktiled)
    assert jnp.allclose(out_ktiled, ref, atol=1e-4, rtol=1e-4)

    print("KERNEL_OK")
</pallas_src>

<mosaic_0001>
module attributes {stable_mosaic.version = 11 : i64} {
  func.func @_pe_kernel_whole_k(%arg0: i32, %arg1: i32, %arg2: memref<32x128xf32, #tpu.memory_space<vmem>>, %arg3: memref<128x128xf32, #tpu.memory_space<vmem>>, %arg4: memref<1x128xf32, #tpu.memory_space<vmem>>, %arg5: memref<32x128xf32, #tpu.memory_space<vmem>>) attributes {dimension_semantics = [#tpu.dimension_semantics<parallel>, #tpu.dimension_semantics<parallel>], iteration_bounds = array<i64: 1, 1>, scalar_prefetch = 0 : i64, scratch_operands = 0 : i64, tpu.core_type = #tpu.core_type<tc>, window_params = [{transform_indices = @transform_0, window_bounds = array<i64: 32, 128>}, {transform_indices = @transform_1, window_bounds = array<i64: 128, 128>}, {transform_indices = @transform_2, window_bounds = array<i64: 1, 128>}, {transform_indices = @transform_3, window_bounds = array<i64: 32, 128>}]} {
    %c0 = arith.constant 0 : index
    %c0_0 = arith.constant 0 : index
    %0 = vector.load %arg2[%c0, %c0_0] : memref<32x128xf32, #tpu.memory_space<vmem>>, vector<32x128xf32>
    %c0_1 = arith.constant 0 : index
    %c0_2 = arith.constant 0 : index
    %1 = vector.load %arg3[%c0_1, %c0_2] : memref<128x128xf32, #tpu.memory_space<vmem>>, vector<128x128xf32>
    %cst = arith.constant dense<0.000000e+00> : vector<32x128xf32>
    %2 = tpu.matmul %0, %1, %cst {dimension_numbers = #tpu.dot_dimension_numbers<[1], [0], [0], [1], [0, 0, 1, 1], [], []>} : vector<32x128xf32>, vector<128x128xf32>, vector<32x128xf32> -> vector<32x128xf32>
    %c0_3 = arith.constant 0 : index
    %c0_4 = arith.constant 0 : index
    %3 = vector.load %arg4[%c0_3, %c0_4] : memref<1x128xf32, #tpu.memory_space<vmem>>, vector<1x128xf32>
    %4 = vector.broadcast %3 : vector<1x128xf32> to vector<32x128xf32>
    %5 = arith.addf %2, %4 : vector<32x128xf32>
    %c0_5 = arith.constant 0 : index
    %c0_6 = arith.constant 0 : index
    %6 = vector.load %arg5[%c0_5, %c0_6] : memref<32x128xf32, #tpu.memory_space<vmem>>, vector<32x128xf32>
    tpu.vector_store %arg5[%c0_5, %c0_6], %5 {strides = array<i32>} : memref<32x128xf32, #tpu.memory_space<vmem>>, vector<32x128xf32>,
    return
  }
  func.func @transform_0(%arg0: i32, %arg1: i32) -> (i32, i32) {
    %c0_i32 = arith.constant 0 : i32
    %c0_i32_0 = arith.constant 0 : i32
    return %arg0, %c0_i32 : i32, i32
  }
  func.func @transform_1(%arg0: i32, %arg1: i32) -> (i32, i32) {
    %c0_i32 = arith.constant 0 : i32
    %c0_i32_0 = arith.constant 0 : i32
    return %c0_i32, %arg1 : i32, i32
  }
  func.func @transform_2(%arg0: i32, %arg1: i32) -> (i32, i32) {
    %c0_i32 = arith.constant 0 : i32
    %c0_i32_0 = arith.constant 0 : i32
    return %c0_i32, %arg1 : i32, i32
  }
  func.func @transform_3(%arg0: i32, %arg1: i32) -> (i32, i32) {
    %c0_i32 = arith.constant 0 : i32
    return %arg0, %arg1 : i32, i32
  }
}

</mosaic_0001>

<llo_original>
// kernel: tpu_custom_call.1
$region0: #{tpu_custom_call.1}
  #allocation0 [shape = 'u32[]', space=smem, size = 0x4, offset = 0x4, fixed_abs, tag = 'smem constant byte address 0x4 - core index']
  #allocation1 [shape = 'u32[144,128]{1,0:T(1,128)}', space=vmem, size = 0x12000, scoped, tag = 'internal scratch']
  %s0 = inlined_call_operand.hbm [shape: f32[32,128], index: 0, kind: input, shape index: {}]
  %s1 = inlined_call_operand.hbm [shape: f32[128,128], index: 1, kind: input, shape index: {}]
  %s2 = inlined_call_operand.vmem [shape: f32[1,128], index: 2, kind: input, shape index: {}]
  %s3 = inlined_call_operand.hbm [shape: f32[32,128], index: 3, kind: output, shape index: {}]
  %s4 = sld [smem:[#allocation0]]
  $region30: #{tpu_custom_call.1} parent=0
    _
  %s6 = ssub.s32 1, %s4
  %s7 = scalar_select 0, %s6, %s4
  $region1: #{tpu_custom_call.1} parent=0
    #allocation2 [shape = 'u8[16384]{0}', space=vmem, size = 0x4000, scoped, tag = 'input window, operand 0, single buffered']
    #allocation3 [shape = 's32[1]{0}', space=sflag, size = 0x4, scoped, tag = 'scoped memory for tpu_custom_call.1']
    #allocation4 [shape = 's32[1]{0}', space=sflag, size = 0x4, scoped, tag = 'scoped memory for tpu_custom_call.1']
    #allocation5 [shape = 'u8[65536]{0}', space=vmem, size = 0x10000, scoped, tag = 'input window, operand 1, single buffered']
    #allocation6 [shape = 's32[1]{0}', space=sflag, size = 0x4, scoped, tag = 'scoped memory for tpu_custom_call.1']
    #allocation7 [shape = 'u8[16384]{0}', space=vmem, size = 0x4000, scoped, tag = 'output window, operand 0, single buffered']
    %8 = vsyncpa [#allocation3], 0
    %9 = vsyncpa [#allocation6], 0
    %10 = vsyncpa [#allocation4], 0
    // Predicated region
    $region2: #{tpu_custom_call.1} parent=1 // pred_check
      _
    $region3: #{tpu_custom_call.1} parent=1 // pred_check_branch
      %12 = sbr.rel (0) target = $region5
    $region4: #{tpu_custom_call.1} parent=1 // pred_region
      %s14 = ssub.s32 512, 512
      %15 = vsyncadd [#allocation3], %s14
      %s16 = sshll.u32 [#allocation2], 4
      %s17 = int_to_ptr.vmem [resolvable:$true] %s16
      %22 = dma.hbm_to_vmem [thread:$0]  %s0, 512, %s17, [#allocation3], 128, 128, 8
    $region5: #{tpu_custom_call.1} parent=1 // pred_fallthru
      _
    // Predicated region
    $region6: #{tpu_custom_call.1} parent=1 // pred_check
      _
    $region7: #{tpu_custom_call.1} parent=1 // pred_check_branch
      %24 = sbr.rel (0) target = $region9
    $region8: #{tpu_custom_call.1} parent=1 // pred_region
      %s26 = ssub.s32 2048, 2048
      %27 = vsyncadd [#allocation6], %s26
      %s28 = sshll.u32 [#allocation5], 4
      %s29 = int_to_ptr.vmem [resolvable:$true] %s28
      %34 = dma.hbm_to_vmem [thread:$0]  %s1, 2048, %s29, [#allocation6], 128, 128, 8
    $region9: #{tpu_custom_call.1} parent=1 // pred_fallthru
      _
    // Predicated region
    $region10: #{tpu_custom_call.1} parent=1 // pred_check
      _
    $region11: #{tpu_custom_call.1} parent=1 // pred_check_branch
      %36 = sbr.rel (0) target = $region13
    $region12: #{tpu_custom_call.1} parent=1 // pred_region
      _
    $region13: #{tpu_custom_call.1} parent=1 // pred_fallthru
      _
    // Predicated region
    $region14: #{tpu_custom_call.1} parent=1 // pred_check
      _
    $region15: #{tpu_custom_call.1} parent=1 // pred_check_branch
      %38 = sbr.rel (0) target = $region17
    $region16: #{tpu_custom_call.1} parent=1 // pred_region
      %39 = dma.done [#allocation3], 512
    $region17: #{tpu_custom_call.1} parent=1 // pred_fallthru
      _
    // Predicated region
    $region18: #{tpu_custom_call.1} parent=1 // pred_check
      _
    $region19: #{tpu_custom_call.1} parent=1 // pred_check_branch
      %41 = sbr.rel (0) target = $region21
    $region20: #{tpu_custom_call.1} parent=1 // pred_region
      %42 = dma.done [#allocation6], 2048
    $region21: #{tpu_custom_call.1} parent=1 // pred_fallthru
      _
    %v43 = vld [vmem:[#allocation2] sm:$0xff]
    %v44 = vld [vmem:[#allocation2 + $0x8] sm:$0xff]
    %v45 = vld [vmem:[#allocation2 + $0x10] sm:$0xff]
    %v46 = vld [vmem:[#allocation2 + $0x18] sm:$0xff]
    %v47 = vld [vmem:[#allocation5] sm:$0xff]
    %v48 = vld [vmem:[#allocation5 + $0x8] sm:$0xff]
    %v49 = vld [vmem:[#allocation5 + $0x10] sm:$0xff]
    %v50 = vld [vmem:[#allocation5 + $0x18] sm:$0xff]
    %v51 = vld [vmem:[#allocation5 + $0x20] sm:$0xff]
    %v52 = vld [vmem:[#allocation5 + $0x28] sm:$0xff]
    %v53 = vld [vmem:[#allocation5 + $0x30] sm:$0xff]
    %v54 = vld [vmem:[#allocation5 + $0x38] sm:$0xff]
    %v55 = vld [vmem:[#allocation5 + $0x40] sm:$0xff]
    %v56 = vld [vmem:[#allocation5 + $0x48] sm:$0xff]
    %v57 = vld [vmem:[#allocation5 + $0x50] sm:$0xff]
    %v58 = vld [vmem:[#allocation5 + $0x58] sm:$0xff]
    %v59 = vld [vmem:[#allocation5 + $0x60] sm:$0xff]
    %v60 = vld [vmem:[#allocation5 + $0x68] sm:$0xff]
    %v61 = vld [vmem:[#allocation5 + $0x70] sm:$0xff]
    %v62 = vld [vmem:[#allocation5 + $0x78] sm:$0xff]
    %v63 = vld [vmem:[%s2] sm:$0x1]
    %v65 = vlaneseq
    %v66 = vshrl.u32 %v65, 7
    %v67 = vsub.s32 0, %v66
    %v68 = vrot.slane %v63, %v67
    %70 = vmatprep.subr.mxu0 0.0
    %71 = vmatpush1.msra.mxu0 %v47
    %72 = vmatprep.subr.mxu0 0.0
    %73 = vmatpush1.msra.mxu0 %v48
    %74 = vmatprep.subr.mxu0 0.0
    %75 = vmatpush1.msra.mxu0 %v49
    %76 = vmatprep.subr.mxu0 0.0
    %77 = vmatpush1.msra.mxu0 %v50
    %78 = vmatprep.subr.mxu0 0.0
    %79 = vmatpush1.msra.mxu0 %v51
    %80 = vmatprep.subr.mxu0 0.0
    %81 = vmatpush1.msra.mxu0 %v52
    %82 = vmatprep.subr.mxu0 0.0
    %83 = vmatpush1.msra.mxu0 %v53
    %84 = vmatprep.subr.mxu0 0.0
    %85 = vmatpush1.msra.mxu0 %v54
    %86 = vmatprep.subr.mxu0 0.0
    %87 = vmatpush1.msra.mxu0 %v55
    %88 = vmatprep.subr.mxu0 0.0
    %89 = vmatpush1.msra.mxu0 %v56
    %90 = vmatprep.subr.mxu0 0.0
    %91 = vmatpush1.msra.mxu0 %v57
    %92 = vmatprep.subr.mxu0 0.0
    %93 = vmatpush1.msra.mxu0 %v58
    %94 = vmatprep.subr.mxu0 0.0
    %95 = vmatpush1.msra.mxu0 %v59
    %96 = vmatprep.subr.mxu0 0.0
    %97 = vmatpush1.msra.mxu0 %v60
    %98 = vmatprep.subr.mxu0 0.0
    %99 = vmatpush1.msra.mxu0 %v61
    %100 = vmatprep.subr.mxu0 0.0
    %101 = vmatpush1.msra.mxu0 %v62
    %102 = vmatprep.subr.mxu0 0.0
    %103 = vmatpush1.msra.mxu0 0.0
    %104 = vmatprep.subr.mxu0 0.0
    %105 = vmatpush1.msra.mxu0 0.0
    %106 = vmatprep.subr.mxu0 0.0
    %107 = vmatpush1.msra.mxu0 0.0
    %108 = vmatprep.subr.mxu0 0.0
    %109 = vmatpush1.msra.mxu0 0.0
    %110 = vmatprep.subr.mxu0 0.0
    %111 = vmatpush1.msra.mxu0 0.0
    %112 = vmatprep.subr.mxu0 0.0
    %113 = vmatpush1.msra.mxu0 0.0
    %114 = vmatprep.subr.mxu0 0.0
    %115 = vmatpush1.msra.mxu0 0.0
    %116 = vmatprep.subr.mxu0 0.0
    %117 = vmatpush1.msra.mxu0 0.0
    %118 = vmatprep.subr.mxu0 0.0
    %119 = vmatpush1.msra.mxu0 0.0
    %120 = vmatprep.subr.mxu0 0.0
    %121 = vmatpush1.msra.mxu0 0.0
    %122 = vmatprep.subr.mxu0 0.0
    %123 = vmatpush1.msra.mxu0 0.0
    %124 = vmatprep.subr.mxu0 0.0
    %125 = vmatpush1.msra.mxu0 0.0
    %126 = vmatprep.subr.mxu0 0.0
    %127 = vmatpush1.msra.mxu0 0.0
    %128 = vmatprep.subr.mxu0 0.0
    %129 = vmatpush1.msra.mxu0 0.0
    %130 = vmatprep.subr.mxu0 0.0
    %131 = vmatpush1.msra.mxu0 0.0
    %132 = vmatprep.subr.mxu0 0.0
    %133 = vmatpush1.msra.mxu0 0.0
    %134 = vmatprep.mubr.f32.mxu0 0.0
    %135 = vmatmul.mubr.f32.gmra.mrb[0].mxu0 %v43
    %v136 = vpop.f32.mrb[0].mxu0
    %v137 = vadd.f32 %v68, %v136
    %v138 = vpop.f32.mrb[0].mxu0
    %139 = vmatprep.mubr.f32.mxu0 0.0
    %140 = vmatmul.mubr.f32.gmra.mrb[0].mxu0 %v44
    %v141 = vpop.f32.mrb[0].mxu0
    %v142 = vadd.f32 %v68, %v141
    %v143 = vpop.f32.mrb[0].mxu0
    %144 = vmatprep.mubr.f32.mxu0 0.0
    %145 = vmatmul.mubr.f32.gmra.mrb[0].mxu0 %v45
    %v146 = vpop.f32.mrb[0].mxu0
    %v147 = vadd.f32 %v68, %v146
    %v148 = vpop.f32.mrb[0].mxu0
    %149 = vmatprep.mubr.f32.mxu0 0.0
    %150 = vmatmul.mubr.f32.gmra.mrb[0].mxu0 %v46
    %v151 = vpop.f32.mrb[0].mxu0
    %v152 = vadd.f32 %v68, %v151
    %v153 = vpop.f32.mrb[0].mxu0
    %154 = vdwg.mxu0
    %155 = vst [vmem:[#allocation7] sm:$0xff] %v137
    %156 = vst [vmem:[#allocation7 + $0x8] sm:$0xff] %v142
    %157 = vst [vmem:[#allocation7 + $0x10] sm:$0xff] %v147
    %158 = vst [vmem:[#allocation7 + $0x18] sm:$0xff] %v152
    // Predicated region
    $region22: #{tpu_custom_call.1} parent=1 // pred_check
      _
    $region23: #{tpu_custom_call.1} parent=1 // pred_check_branch
      %160 = sbr.rel (0) target = $region25
    $region24: #{tpu_custom_call.1} parent=1 // pred_region
      %s162 = ssub.s32 512, 512
      %163 = vsyncadd [#allocation4], %s162
      %s164 = sshll.u32 [#allocation7], 4
      %s165 = int_to_ptr.vmem [resolvable:$true] %s164
      %170 = dma.vmem_to_hbm [thread:$0]  %s165, 512, %s3, [#allocation4], 128, 128, 8
    $region25: #{tpu_custom_call.1} parent=1 // pred_fallthru
      _
    // Predicated region
    $region26: #{tpu_custom_call.1} parent=1 // pred_check
      _
    $region27: #{tpu_custom_call.1} parent=1 // pred_check_branch
      %172 = sbr.rel (0) target = $region29
    $region28: #{tpu_custom_call.1} parent=1 // pred_region
      %173 = dma.done [#allocation4], 512
    $region29: #{tpu_custom_call.1} parent=1 // pred_fallthru
      _
    %174 = vsyncpa [#allocation3], 1
    %175 = vsyncpa [#allocation6], 1
    %176 = vsyncpa [#allocation4], 1

</llo_original>
